<compile_context>
chip_gen: v7x
topology: tpu7x:2x2x1
jax: 0.10.0
libtpu: 0.0.40
codegen_flags: <defaults>
</compile_context>

<pallas_src>
import jax
import jax.numpy as jnp
from jax.experimental import pallas as pl
from jax.experimental.pallas import tpu as pltpu


def _round_up(v, m):
    return ((v + m - 1) // m) * m


def _vmem_capacity_bytes():
    """Physical VMEM of the current TPU generation (conservative fallback)."""
    try:
        info = pltpu.get_tpu_info()
        cap = getattr(info, "vmem_capacity_bytes", None)
        if cap:
            return int(cap)
    except Exception:
        pass
    return 64 * 1024 * 1024  # v7x per-TensorCore VMEM (smallest of v5e/v6e/v7x)


def _choose_tiles(B, N, D, Qp, itemsize):
    """Pick (batch-tile tb, in-kernel chunk cb), both multiples of 8, cb | tb."""
    vmem_cap = _vmem_capacity_bytes()

    Np = _round_up(N, 8)        # sublane padding of the (N, D) minor dims
    Dp = _round_up(D, 128)      # lane padding

    # HBM bytes a grid step actually moves per batch row (DMA cost).
    row_hbm = N * D * itemsize
    # VMEM bytes per batch row for the pipelined blocks: x (2 buffers, padded
    # layout) + output rows (2 buffers).
    row_vmem = 2 * Np * Dp * itemsize + 2 * Dp * max(itemsize, 4)

    # Budget ~55% of physical VMEM for the pipelined blocks; reserve a fixed
    # allowance for the per-chunk f32 intermediates (h, w*x) and the weights.
    budget = int(vmem_cap * 0.55)
    fixed = 2 * (D * Qp * 4 + 2 * Qp * 4)          # wT / bias / query (double-buffered)
    chunk_allowance = 6 * 1024 * 1024
    avail = max(budget - fixed - chunk_allowance, 1 * 1024 * 1024)
    tb_vmem = max(8, (avail // row_vmem) // 8 * 8)

    # DMA-amortization target: ~8 MiB of x per grid step (>> 0.35 us step cost
    # even at v7x's 3.2 TB/s HBM).
    target_x_bytes = 8 * 1024 * 1024
    tb_bw = max(8, _round_up(pl.cdiv(target_x_bytes, row_hbm), 8))

    tb = min(tb_vmem, tb_bw)

    # Keep >= ~8 grid steps (>= 4 per v7x TensorCore, so each core still
    # software-pipelines) whenever each step would still move >= ~1 MiB.
    min_steps = 8
    min_step_rows = max(8, _round_up(pl.cdiv(1 * 1024 * 1024, row_hbm), 8))
    if B >= min_steps * min_step_rows:
        tb = min(tb, _round_up(pl.cdiv(B, min_steps), 8))

    tb = max(8, min(tb, _round_up(B, 8)))

    # In-kernel chunk: keep the f32 h slab + f32 elementwise temps within the
    # chunk allowance while feeding the MXU plenty of rows per matmul.
    cb_cap = max(8, (chunk_allowance // (Np * (Qp + 2 * Dp) * 4)) // 8 * 8)
    cb = min(tb, cb_cap)
    # Make tb a multiple of cb so the in-kernel loop has no remainder.
    tb = max(cb, (tb // cb) * cb)
    return tb, cb


def _make_kernel(cb):
    def kernel(x_ref, wT_ref, b_ref, q_ref, o_ref):
        # x_ref : (TB, N, D)   tile of TB batch elements
        # wT_ref: (D, Qp)      linear weight, transposed + lane-padded
        # b_ref : (1, Qp)      linear bias, lane-padded with zeros
        # q_ref : (1, Qp)      query vector, lane-padded with zeros
        # o_ref : (TB, D)      output rows for this tile
        TB, N, D = x_ref.shape
        Qp = wT_ref.shape[1]

        wT = wT_ref[...]
        b = b_ref[...]
        q = q_ref[...]

        num_chunks = TB // cb  # static Python int

        def body(c, carry):
            start = c * cb
            if not isinstance(start, int):
                start = pl.multiple_of(start, cb)
            x = x_ref[pl.ds(start, cb)]                            # (cb, N, D)

            # Projection for cb*N rows in one MXU matmul, tanh on the EUP.
            h = jnp.tanh(
                jnp.dot(x.reshape(cb * N, D), wT,
                        preferred_element_type=jnp.float32)
                + b
            ).reshape(cb, N, Qp)                                   # f32

            # Scores via VPU multiply + lane reduce over Qp (padded lanes add 0).
            s = jnp.sum(h * q, axis=-1, keepdims=True)             # (cb, N, 1)

            # Per-batch softmax over the N input vectors (max-stabilized,
            # exact denominator — kernel is memory-bound, divide is free).
            s = s - jnp.max(s, axis=1, keepdims=True)
            e = jnp.exp(s)
            w = e / jnp.sum(e, axis=1, keepdims=True)

            # Weighted sum: (cb, N, 1) * (cb, N, D) -> sublane-reduce -> (cb, D).
            res = jnp.sum(w * x, axis=1)
            o_ref[pl.ds(start, cb), :] = res.astype(o_ref.dtype)
            return carry

        if num_chunks == 1:
            body(0, 0)
        else:
            jax.lax.fori_loop(0, num_chunks, body, 0)

    return kernel


def additive_attention(x, linear_w, linear_b, query_vector, *, block_b=None):
    """
    Args:
        x:            (B, N, D)  input vectors
        linear_w:     (Q, D)     nn.Linear weight (out x in layout)
        linear_b:     (Q,)       nn.Linear bias
        query_vector: (Q,)
        block_b:      optional override for batch elements per grid step
    Returns:
        (B, D)
    """
    x = jnp.asarray(x)
    linear_w = jnp.asarray(linear_w, dtype=jnp.float32)
    linear_b = jnp.asarray(linear_b, dtype=jnp.float32)
    query_vector = jnp.asarray(query_vector, dtype=jnp.float32)

    B, N, D = x.shape
    Q = query_vector.shape[0]

    # Lane-pad the query dimension to a multiple of 128. Zero-padded weight /
    # bias / query lanes contribute exactly 0 to the scores.
    Qp = _round_up(Q, 128)
    # Keep the MXU on its native path when the activations are bf16.
    param_dtype = jnp.bfloat16 if x.dtype == jnp.bfloat16 else jnp.float32
    wT = jnp.zeros((D, Qp), param_dtype).at[:, :Q].set(linear_w.T.astype(param_dtype))
    b2 = jnp.zeros((1, Qp), jnp.float32).at[:, :Q].set(linear_b)
    q2 = jnp.zeros((1, Qp), jnp.float32).at[:, :Q].set(query_vector)

    itemsize = x.dtype.itemsize
    tb, cb = _choose_tiles(B, N, D, Qp, itemsize)
    if block_b is not None:
        tb = max(8, (int(block_b) // 8) * 8)
        cb = min(cb, tb)
        tb = max(cb, (tb // cb) * cb)

    Bp = pl.cdiv(B, tb) * tb
    if Bp != B:
        # Zero-padded batch rows give a uniform softmax over zero vectors
        # (finite, no NaNs) and are sliced off below.
        x = jnp.pad(x, ((0, Bp - B), (0, 0), (0, 0)))

    vmem_cap = _vmem_capacity_bytes()
    vmem_limit = min(int(vmem_cap * 0.75), 112 * 1024 * 1024)

    out = pl.pallas_call(
        _make_kernel(cb),
        out_shape=jax.ShapeDtypeStruct((Bp, D), x.dtype),
        grid_spec=pltpu.PrefetchScalarGridSpec(
            num_scalar_prefetch=0,
            grid=(Bp // tb,),
            in_specs=[
                pl.BlockSpec((tb, N, D), lambda i: (i, 0, 0)),  # batch tile
                pl.BlockSpec((D, Qp), lambda i: (0, 0)),        # shared weight
                pl.BlockSpec((1, Qp), lambda i: (0, 0)),        # shared bias
                pl.BlockSpec((1, Qp), lambda i: (0, 0)),        # shared query
            ],
            out_specs=pl.BlockSpec((tb, D), lambda i: (i, 0)),  # output rows
        ),
        compiler_params=pltpu.CompilerParams(
            dimension_semantics=("parallel",),
            vmem_limit_bytes=vmem_limit,
        ),
    )(x, wT, b2, q2)

    return out[:B]


def _reference(x, linear_w, linear_b, query_vector):
    h = jnp.tanh(jnp.einsum("bnd,qd->bnq", x, linear_w) + linear_b)
    scores = jnp.einsum("bnq,q->bn", h, query_vector)
    weight = jax.nn.softmax(scores, axis=1)
    return jnp.einsum("bn,bnd->bd", weight, x)


if __name__ == "__main__":
    # Small shapes consistent with the module's forward.
    B, N, D, Q = 2, 8, 32, 16   # batch, n_input_vector, input_vector_dim, query_vector_dim

    key = jax.random.PRNGKey(0)
    k_x, k_w, k_b, k_q = jax.random.split(key, 4)

    x = jax.random.normal(k_x, (B, N, D), dtype=jnp.float32)
    bound = 1.0 / jnp.sqrt(D)
    linear_w = jax.random.uniform(k_w, (Q, D), minval=-bound, maxval=bound, dtype=jnp.float32)
    linear_b = jax.random.uniform(k_b, (Q,), minval=-bound, maxval=bound, dtype=jnp.float32)
    query_vector = jax.random.uniform(k_q, (Q,), minval=-0.1, maxval=0.1, dtype=jnp.float32)

    out = additive_attention(x, linear_w, linear_b, query_vector)
    out = jax.block_until_ready(out)

    ref = _reference(x, linear_w, linear_b, query_vector)
    assert out.shape == (B, D)
    # MXU default-precision f32 matmul (bf16 passes) is the only remaining
    # numerical difference; 2e-3 still catches any real math / layout bug.
    assert jnp.allclose(out, ref, atol=2e-3, rtol=2e-3), "Pallas result mismatch vs reference"

    print("KERNEL_OK")
</pallas_src>

<mosaic_0001>
module attributes {stable_mosaic.version = 11 : i64} {
  func.func @kernel(%arg0: i32, %arg1: memref<8x8x32xf32, #tpu.memory_space<vmem>>, %arg2: memref<32x128xf32, #tpu.memory_space<vmem>>, %arg3: memref<1x128xf32, #tpu.memory_space<vmem>>, %arg4: memref<1x128xf32, #tpu.memory_space<vmem>>, %arg5: memref<8x32xf32, #tpu.memory_space<vmem>>) attributes {dimension_semantics = [#tpu.dimension_semantics<parallel>], iteration_bounds = array<i64: 1>, scalar_prefetch = 0 : i64, scratch_operands = 0 : i64, tpu.core_type = #tpu.core_type<tc>, window_params = [{transform_indices = @transform_0, window_bounds = array<i64: 8, 8, 32>}, {pipeline_mode = #tpu.pipeline_mode<synchronous>, transform_indices = @transform_1, window_bounds = array<i64: 32, 128>}, {pipeline_mode = #tpu.pipeline_mode<synchronous>, transform_indices = @transform_2, window_bounds = array<i64: 1, 128>}, {pipeline_mode = #tpu.pipeline_mode<synchronous>, transform_indices = @transform_3, window_bounds = array<i64: 1, 128>}, {transform_indices = @transform_4, window_bounds = array<i64: 8, 32>}]} {
    %c0 = arith.constant 0 : index
    %c0_0 = arith.constant 0 : index
    %0 = vector.load %arg2[%c0, %c0_0] : memref<32x128xf32, #tpu.memory_space<vmem>>, vector<32x128xf32>
    %c0_1 = arith.constant 0 : index
    %c0_2 = arith.constant 0 : index
    %1 = vector.load %arg3[%c0_1, %c0_2] : memref<1x128xf32, #tpu.memory_space<vmem>>, vector<1x128xf32>
    %c0_3 = arith.constant 0 : index
    %c0_4 = arith.constant 0 : index
    %2 = vector.load %arg4[%c0_3, %c0_4] : memref<1x128xf32, #tpu.memory_space<vmem>>, vector<1x128xf32>
    %c0_5 = arith.constant 0 : index
    %c0_6 = arith.constant 0 : index
    %c0_7 = arith.constant 0 : index
    %3 = vector.load %arg1[%c0_5, %c0_6, %c0_7] : memref<8x8x32xf32, #tpu.memory_space<vmem>>, vector<8x8x32xf32>
    %4 = vector.shape_cast %3 : vector<8x8x32xf32> to vector<64x32xf32>
    %cst = arith.constant dense<0.000000e+00> : vector<64x128xf32>
    %5 = tpu.matmul %4, %0, %cst {dimension_numbers = #tpu.dot_dimension_numbers<[1], [0], [0], [1], [0, 0, 1, 1], [], []>} : vector<64x32xf32>, vector<32x128xf32>, vector<64x128xf32> -> vector<64x128xf32>
    %6 = vector.broadcast %1 : vector<1x128xf32> to vector<64x128xf32>
    %7 = arith.addf %5, %6 : vector<64x128xf32>
    %8 = math.tanh %7 : vector<64x128xf32>
    %9 = vector.shape_cast %8 : vector<64x128xf32> to vector<8x8x128xf32>
    %10 = vector.shape_cast %2 : vector<1x128xf32> to vector<1x1x128xf32>
    %11 = vector.broadcast %10 : vector<1x1x128xf32> to vector<8x8x128xf32>
    %12 = arith.mulf %9, %11 : vector<8x8x128xf32>
    %cst_8 = arith.constant dense<0.000000e+00> : vector<8x8xf32>
    %13 = vector.multi_reduction <add>, %12, %cst_8 [2] : vector<8x8x128xf32> to vector<8x8xf32>
    %14 = vector.shape_cast %13 : vector<8x8xf32> to vector<8x8x1xf32>
    %cst_9 = arith.constant dense<0xFF800000> : vector<8x1xf32>
    %15 = vector.multi_reduction <maximumf>, %14, %cst_9 [1] : vector<8x8x1xf32> to vector<8x1xf32>
    %16 = vector.shape_cast %15 : vector<8x1xf32> to vector<8x1x1xf32>
    %17 = vector.broadcast %16 : vector<8x1x1xf32> to vector<8x8x1xf32>
    %18 = arith.subf %14, %17 : vector<8x8x1xf32>
    %19 = math.exp %18 : vector<8x8x1xf32>
    %cst_10 = arith.constant dense<0.000000e+00> : vector<8x1xf32>
    %20 = vector.multi_reduction <add>, %19, %cst_10 [1] : vector<8x8x1xf32> to vector<8x1xf32>
    %21 = vector.shape_cast %20 : vector<8x1xf32> to vector<8x1x1xf32>
    %22 = vector.broadcast %21 : vector<8x1x1xf32> to vector<8x8x1xf32>
    %23 = arith.divf %19, %22 : vector<8x8x1xf32>
    %24 = vector.broadcast %23 : vector<8x8x1xf32> to vector<8x8x32xf32>
    %25 = arith.mulf %24, %3 : vector<8x8x32xf32>
    %cst_11 = arith.constant dense<0.000000e+00> : vector<8x32xf32>
    %26 = vector.multi_reduction <add>, %25, %cst_11 [1] : vector<8x8x32xf32> to vector<8x32xf32>
    %c0_12 = arith.constant 0 : index
    %c0_13 = arith.constant 0 : index
    %27 = vector.load %arg5[%c0_12, %c0_13] : memref<8x32xf32, #tpu.memory_space<vmem>>, vector<8x32xf32>
    tpu.vector_store %arg5[%c0_12, %c0_13], %26 {strides = array<i32>} : memref<8x32xf32, #tpu.memory_space<vmem>>, vector<8x32xf32>,
    return
  }
  func.func @transform_0(%arg0: i32) -> (i32, i32, i32) {
    %c0_i32 = arith.constant 0 : i32
    %c0_i32_0 = arith.constant 0 : i32
    %c0_i32_1 = arith.constant 0 : i32
    return %arg0, %c0_i32, %c0_i32_0 : i32, i32, i32
  }
  func.func @transform_1(%arg0: i32) -> (i32, i32) {
    %c0_i32 = arith.constant 0 : i32
    %c0_i32_0 = arith.constant 0 : i32
    %c0_i32_1 = arith.constant 0 : i32
    return %c0_i32, %c0_i32_0 : i32, i32
  }
  func.func @transform_2(%arg0: i32) -> (i32, i32) {
    %c0_i32 = arith.constant 0 : i32
    %c0_i32_0 = arith.constant 0 : i32
    %c0_i32_1 = arith.constant 0 : i32
    return %c0_i32, %c0_i32_0 : i32, i32
  }
  func.func @transform_3(%arg0: i32) -> (i32, i32) {
    %c0_i32 = arith.constant 0 : i32
    %c0_i32_0 = arith.constant 0 : i32
    %c0_i32_1 = arith.constant 0 : i32
    return %c0_i32, %c0_i32_0 : i32, i32
  }
  func.func @transform_4(%arg0: i32) -> (i32, i32) {
    %c0_i32 = arith.constant 0 : i32
    %c0_i32_0 = arith.constant 0 : i32
    return %arg0, %c0_i32 : i32, i32
  }
}

</mosaic_0001>

<llo_original>
// kernel: tpu_custom_call.1
$region0: #{tpu_custom_call.1}
  #allocation0 [shape = 'u32[]', space=smem, size = 0x4, offset = 0x4, fixed_abs, tag = 'smem constant byte address 0x4 - core index']
  #allocation1 [shape = 'u32[144,128]{1,0:T(1,128)}', space=vmem, size = 0x12000, scoped, tag = 'internal scratch']
  %s0 = inlined_call_operand.hbm [shape: f32[8,8,32], index: 0, kind: input, shape index: {}]
  %s1 = inlined_call_operand.hbm [shape: f32[32,128], index: 1, kind: input, shape index: {}]
  %s2 = inlined_call_operand.vmem [shape: f32[1,128], index: 2, kind: input, shape index: {}]
  %s3 = inlined_call_operand.vmem [shape: f32[1,128], index: 3, kind: input, shape index: {}]
  %s4 = inlined_call_operand.hbm [shape: f32[8,32], index: 4, kind: output, shape index: {}]
  %s5 = sld [smem:[#allocation0]]
  $region34: #{tpu_custom_call.1} parent=0
    _
  %s7 = ssub.s32 1, %s5
  %s8 = scalar_select 0, %s7, %s5
  $region1: #{tpu_custom_call.1} parent=0
    #allocation2 [shape = 'u8[32768]{0}', space=vmem, size = 0x8000, scoped, tag = 'input window, operand 0, single buffered']
    #allocation3 [shape = 's32[1]{0}', space=sflag, size = 0x4, scoped, tag = 'scoped memory for tpu_custom_call.1']
    #allocation4 [shape = 's32[1]{0}', space=sflag, size = 0x4, scoped, tag = 'scoped memory for tpu_custom_call.1']
    #allocation5 [shape = 'u8[16384]{0}', space=vmem, size = 0x4000, scoped, tag = 'input window, operand 1, single buffered']
    #allocation6 [shape = 's32[1]{0}', space=sflag, size = 0x4, scoped, tag = 'scoped memory for tpu_custom_call.1']
    #allocation7 [shape = 'u8[4096]{0}', space=vmem, size = 0x1000, scoped, tag = 'output window, operand 0, single buffered']
    %9 = vsyncpa [#allocation3], 0
    %10 = vsyncpa [#allocation6], 0
    %11 = vsyncpa [#allocation4], 0
    // Predicated region
    $region2: #{tpu_custom_call.1} parent=1 // pred_check
      _
    $region3: #{tpu_custom_call.1} parent=1 // pred_check_branch
      %13 = sbr.rel (0) target = $region5
    $region4: #{tpu_custom_call.1} parent=1 // pred_region
      %s15 = ssub.s32 1024, 1024
      %16 = vsyncadd [#allocation3], %s15
      %s17 = sshll.u32 [#allocation2], 4
      %s18 = int_to_ptr.vmem [resolvable:$true] %s17
      %23 = dma.hbm_to_vmem [thread:$0]  %s0, 1024, %s18, [#allocation3], 128, 128, 8
    $region5: #{tpu_custom_call.1} parent=1 // pred_fallthru
      _
    // Predicated region
    $region6: #{tpu_custom_call.1} parent=1 // pred_check
      _
    $region7: #{tpu_custom_call.1} parent=1 // pred_check_branch
      %25 = sbr.rel (0) target = $region9
    $region8: #{tpu_custom_call.1} parent=1 // pred_region
      %s27 = ssub.s32 512, 512
      %28 = vsyncadd [#allocation6], %s27
      %s29 = sshll.u32 [#allocation5], 4
      %s30 = int_to_ptr.vmem [resolvable:$true] %s29
      %35 = dma.hbm_to_vmem [thread:$0]  %s1, 512, %s30, [#allocation6], 128, 128, 8
    $region9: #{tpu_custom_call.1} parent=1 // pred_fallthru
      _
    // Predicated region
    $region10: #{tpu_custom_call.1} parent=1 // pred_check
      _
    $region11: #{tpu_custom_call.1} parent=1 // pred_check_branch
      %37 = sbr.rel (0) target = $region13
    $region12: #{tpu_custom_call.1} parent=1 // pred_region
      _
    $region13: #{tpu_custom_call.1} parent=1 // pred_fallthru
      _
    // Predicated region
    $region14: #{tpu_custom_call.1} parent=1 // pred_check
      _
    $region15: #{tpu_custom_call.1} parent=1 // pred_check_branch
      %39 = sbr.rel (0) target = $region17
    $region16: #{tpu_custom_call.1} parent=1 // pred_region
      _
    $region17: #{tpu_custom_call.1} parent=1 // pred_fallthru
      _
    // Predicated region
    $region18: #{tpu_custom_call.1} parent=1 // pred_check
      _
    $region19: #{tpu_custom_call.1} parent=1 // pred_check_branch
      %41 = sbr.rel (0) target = $region21
    $region20: #{tpu_custom_call.1} parent=1 // pred_region
      %42 = dma.done [#allocation3], 1024
    $region21: #{tpu_custom_call.1} parent=1 // pred_fallthru
      _
    // Predicated region
    $region22: #{tpu_custom_call.1} parent=1 // pred_check
      _
    $region23: #{tpu_custom_call.1} parent=1 // pred_check_branch
      %44 = sbr.rel (0) target = $region25
    $region24: #{tpu_custom_call.1} parent=1 // pred_region
      %45 = dma.done [#allocation6], 512
    $region25: #{tpu_custom_call.1} parent=1 // pred_fallthru
      _
    %v46 = vld [vmem:[#allocation5] sm:$0xff]
    %v47 = vld [vmem:[#allocation5 + $0x8] sm:$0xff]
    %v48 = vld [vmem:[#allocation5 + $0x10] sm:$0xff]
    %v49 = vld [vmem:[#allocation5 + $0x18] sm:$0xff]
    %v50 = vld [vmem:[%s2] sm:$0x1]
    %v51 = vld [vmem:[%s3] sm:$0x1]
    %v52 = vld [vmem:[#allocation2] sm:$0xff]
    %v53 = vld [vmem:[#allocation2 + $0x8] sm:$0xff]
    %v54 = vld [vmem:[#allocation2 + $0x10] sm:$0xff]
    %v55 = vld [vmem:[#allocation2 + $0x18] sm:$0xff]
    %v56 = vld [vmem:[#allocation2 + $0x20] sm:$0xff]
    %v57 = vld [vmem:[#allocation2 + $0x28] sm:$0xff]
    %v58 = vld [vmem:[#allocation2 + $0x30] sm:$0xff]
    %v59 = vld [vmem:[#allocation2 + $0x38] sm:$0xff]
    %v61 = vlaneseq
    %v62 = vshrl.u32 %v61, 7
    %v63 = vsub.s32 0, %v62
    %v64 = vrot.slane %v50, %v63
    %vm66 = vcmask 261120
    %v68 = vsel %vm66, %v52, 0
    %v71 = vsel %vm66, %v53, 0
    %v74 = vsel %vm66, %v54, 0
    %v77 = vsel %vm66, %v55, 0
    %v80 = vsel %vm66, %v56, 0
    %v83 = vsel %vm66, %v57, 0
    %v86 = vsel %vm66, %v58, 0
    %v89 = vsel %vm66, %v59, 0
    %91 = vmatprep.subr.mxu0 0.0
    %92 = vmatpush1.msra.mxu0 %v46
    %93 = vmatprep.subr.mxu0 0.0
    %94 = vmatpush1.msra.mxu0 %v47
    %95 = vmatprep.subr.mxu0 0.0
    %96 = vmatpush1.msra.mxu0 %v48
    %97 = vmatprep.subr.mxu0 0.0
    %98 = vmatpush1.msra.mxu0 %v49
    %99 = vmatprep.subr.mxu0 0.0
    %100 = vmatpush1.msra.mxu0 0.0
    %101 = vmatprep.subr.mxu0 0.0
    %102 = vmatpush1.msra.mxu0 0.0
    %103 = vmatprep.subr.mxu0 0.0
    %104 = vmatpush1.msra.mxu0 0.0
    %105 = vmatprep.subr.mxu0 0.0
    %106 = vmatpush1.msra.mxu0 0.0
    %107 = vmatprep.subr.mxu0 0.0
    %108 = vmatpush1.msra.mxu0 0.0
    %109 = vmatprep.subr.mxu0 0.0
    %110 = vmatpush1.msra.mxu0 0.0
    %111 = vmatprep.subr.mxu0 0.0
    %112 = vmatpush1.msra.mxu0 0.0
    %113 = vmatprep.subr.mxu0 0.0
    %114 = vmatpush1.msra.mxu0 0.0
    %115 = vmatprep.subr.mxu0 0.0
    %116 = vmatpush1.msra.mxu0 0.0
    %117 = vmatprep.subr.mxu0 0.0
    %118 = vmatpush1.msra.mxu0 0.0
    %119 = vmatprep.subr.mxu0 0.0
    %120 = vmatpush1.msra.mxu0 0.0
    %121 = vmatprep.subr.mxu0 0.0
    %122 = vmatpush1.msra.mxu0 0.0
    %123 = vmatprep.subr.mxu0 0.0
    %124 = vmatpush1.msra.mxu0 0.0
    %125 = vmatprep.subr.mxu0 0.0
    %126 = vmatpush1.msra.mxu0 0.0
    %127 = vmatprep.subr.mxu0 0.0
    %128 = vmatpush1.msra.mxu0 0.0
    %129 = vmatprep.subr.mxu0 0.0
    %130 = vmatpush1.msra.mxu0 0.0
    %131 = vmatprep.subr.mxu0 0.0
    %132 = vmatpush1.msra.mxu0 0.0
    %133 = vmatprep.subr.mxu0 0.0
    %134 = vmatpush1.msra.mxu0 0.0
    %135 = vmatprep.subr.mxu0 0.0
    %136 = vmatpush1.msra.mxu0 0.0
    %137 = vmatprep.subr.mxu0 0.0
    %138 = vmatpush1.msra.mxu0 0.0
    %139 = vmatprep.subr.mxu0 0.0
    %140 = vmatpush1.msra.mxu0 0.0
    %141 = vmatprep.subr.mxu0 0.0
    %142 = vmatpush1.msra.mxu0 0.0
    %143 = vmatprep.subr.mxu0 0.0
    %144 = vmatpush1.msra.mxu0 0.0
    %145 = vmatprep.subr.mxu0 0.0
    %146 = vmatpush1.msra.mxu0 0.0
    %147 = vmatprep.subr.mxu0 0.0
    %148 = vmatpush1.msra.mxu0 0.0
    %149 = vmatprep.subr.mxu0 0.0
    %150 = vmatpush1.msra.mxu0 0.0
    %151 = vmatprep.subr.mxu0 0.0
    %152 = vmatpush1.msra.mxu0 0.0
    %153 = vmatprep.subr.mxu0 0.0
    %154 = vmatpush1.msra.mxu0 0.0
    %155 = vmatprep.mubr.f32.mxu0 0.0
    %156 = vmatmul.mubr.f32.gmra.mrb[0].mxu0 %v68
    %v157 = vpop.f32.mrb[0].mxu0
    %v158 = vadd.f32 %v64, %v157
    %v159 = vpop.f32.mrb[0].mxu0
    %160 = vmatprep.mubr.f32.mxu0 0.0
    %161 = vmatmul.mubr.f32.gmra.mrb[0].mxu0 %v71
    %v162 = vpop.f32.mrb[0].mxu0
    %v163 = vadd.f32 %v64, %v162
    %v164 = vpop.f32.mrb[0].mxu0
    %165 = vmatprep.mubr.f32.mxu0 0.0
    %166 = vmatmul.mubr.f32.gmra.mrb[0].mxu0 %v74
    %v167 = vpop.f32.mrb[0].mxu0
    %v168 = vadd.f32 %v64, %v167
    %v169 = vpop.f32.mrb[0].mxu0
    %170 = vmatprep.mubr.f32.mxu0 0.0
    %171 = vmatmul.mubr.f32.gmra.mrb[0].mxu0 %v77
    %v172 = vpop.f32.mrb[0].mxu0
    %v173 = vadd.f32 %v64, %v172
    %v174 = vpop.f32.mrb[0].mxu0
    %175 = vmatprep.mubr.f32.mxu0 0.0
    %176 = vmatmul.mubr.f32.gmra.mrb[0].mxu0 %v80
    %v177 = vpop.f32.mrb[0].mxu0
    %v178 = vadd.f32 %v64, %v177
    %v179 = vpop.f32.mrb[0].mxu0
    %180 = vmatprep.mubr.f32.mxu0 0.0
    %181 = vmatmul.mubr.f32.gmra.mrb[0].mxu0 %v83
    %v182 = vpop.f32.mrb[0].mxu0
    %v183 = vadd.f32 %v64, %v182
    %v184 = vpop.f32.mrb[0].mxu0
    %185 = vmatprep.mubr.f32.mxu0 0.0
    %186 = vmatmul.mubr.f32.gmra.mrb[0].mxu0 %v86
    %v187 = vpop.f32.mrb[0].mxu0
    %v188 = vadd.f32 %v64, %v187
    %v189 = vpop.f32.mrb[0].mxu0
    %190 = vmatprep.mubr.f32.mxu0 0.0
    %191 = vmatmul.mubr.f32.gmra.mrb[0].mxu0 %v89
    %v192 = vpop.f32.mrb[0].mxu0
    %v193 = vadd.f32 %v64, %v192
    %v194 = vpop.f32.mrb[0].mxu0
    %195 = vdwg.mxu0
    %v196 = vtanh.pop %v158
    %v197 = vtanh.pop %v163
    %v198 = vtanh.pop %v168
    %v199 = vtanh.pop %v173
    %v200 = vtanh.pop %v178
    %v201 = vtanh.pop %v183
    %v202 = vtanh.pop %v188
    %v203 = vtanh.pop %v193
    %v205 = vlaneseq
    %v206 = vshrl.u32 %v205, 7
    %v207 = vsub.s32 0, %v206
    %v208 = vrot.slane %v51, %v207
    %v210 = vmul.f32 %v196, %v208
    %v211 = vmul.f32 %v197, %v208
    %v212 = vmul.f32 %v198, %v208
    %v213 = vmul.f32 %v199, %v208
    %v214 = vmul.f32 %v200, %v208
    %v215 = vmul.f32 %v201, %v208
    %v216 = vmul.f32 %v202, %v208
    %v217 = vmul.f32 %v203, %v208
    %218 = vadd.xlane.f32.xlu0 %v210
    %v219 = vpop.xlane.xlu0 %218
    %220 = vadd.xlane.f32.xlu0 %v211
    %v221 = vpop.xlane.xlu0 %220
    %222 = vadd.xlane.f32.xlu0 %v212
    %v223 = vpop.xlane.xlu0 %222
    %224 = vadd.xlane.f32.xlu0 %v213
    %v225 = vpop.xlane.xlu0 %224
    %226 = vadd.xlane.f32.xlu0 %v214
    %v227 = vpop.xlane.xlu0 %226
    %228 = vadd.xlane.f32.xlu0 %v215
    %v229 = vpop.xlane.xlu0 %228
    %230 = vadd.xlane.f32.xlu0 %v216
    %v231 = vpop.xlane.xlu0 %230
    %232 = vadd.xlane.f32.xlu0 %v217
    %v233 = vpop.xlane.xlu0 %232
    %v234 = vrot.slane %v219, 4
    %v235 = vmax.f32 %v219, %v234
    %v236 = vrot.slane %v235, 2
    %v237 = vmax.f32 %v235, %v236
    %v238 = vrot.slane %v237, 1
    %v239 = vmax.f32 %v237, %v238
    %v240 = vrot.slane %v221, 4
    %v241 = vmax.f32 %v221, %v240
    %v242 = vrot.slane %v241, 2
    %v243 = vmax.f32 %v241, %v242
    %v244 = vrot.slane %v243, 1
    %v245 = vmax.f32 %v243, %v244
    %v246 = vrot.slane %v223, 4
    %v247 = vmax.f32 %v223, %v246
    %v248 = vrot.slane %v247, 2
    %v249 = vmax.f32 %v247, %v248
    %v250 = vrot.slane %v249, 1
    %v251 = vmax.f32 %v249, %v250
    %v252 = vrot.slane %v225, 4
    %v253 = vmax.f32 %v225, %v252
    %v254 = vrot.slane %v253, 2
    %v255 = vmax.f32 %v253, %v254
    %v256 = vrot.slane %v255, 1
    %v257 = vmax.f32 %v255, %v256
    %v258 = vrot.slane %v227, 4
    %v259 = vmax.f32 %v227, %v258
    %v260 = vrot.slane %v259, 2
    %v261 = vmax.f32 %v259, %v260
    %v262 = vrot.slane %v261, 1
    %v263 = vmax.f32 %v261, %v262
    %v264 = vrot.slane %v229, 4
    %v265 = vmax.f32 %v229, %v264
    %v266 = vrot.slane %v265, 2
    %v267 = vmax.f32 %v265, %v266
    %v268 = vrot.slane %v267, 1
    %v269 = vmax.f32 %v267, %v268
    %v270 = vrot.slane %v231, 4
    %v271 = vmax.f32 %v231, %v270
    %v272 = vrot.slane %v271, 2
    %v273 = vmax.f32 %v271, %v272
    %v274 = vrot.slane %v273, 1
    %v275 = vmax.f32 %v273, %v274
    %v276 = vrot.slane %v233, 4
    %v277 = vmax.f32 %v233, %v276
    %v278 = vrot.slane %v277, 2
    %v279 = vmax.f32 %v277, %v278
    %v280 = vrot.slane %v279, 1
    %v281 = vmax.f32 %v279, %v280
    %v282 = vsub.f32 %v219, %v239
    %v283 = vsub.f32 %v221, %v245
    %v284 = vsub.f32 %v223, %v251
    %v285 = vsub.f32 %v225, %v257
    %v286 = vsub.f32 %v227, %v263
    %v287 = vsub.f32 %v229, %v269
    %v288 = vsub.f32 %v231, %v275
    %v289 = vsub.f32 %v233, %v281
    %v290 = vmul.f32 %v282, 1.442695
    %v291 = vpow.pop %v290
    %v292 = vmul.f32 %v283, 1.442695
    %v293 = vpow.pop %v292
    %v294 = vmul.f32 %v284, 1.442695
    %v295 = vpow.pop %v294
    %v296 = vmul.f32 %v285, 1.442695
    %v297 = vpow.pop %v296
    %v298 = vmul.f32 %v286, 1.442695
    %v299 = vpow.pop %v298
    %v300 = vmul.f32 %v287, 1.442695
    %v301 = vpow.pop %v300
    %v302 = vmul.f32 %v288, 1.442695
    %v303 = vpow.pop %v302
    %v304 = vmul.f32 %v289, 1.442695
    %v305 = vpow.pop %v304
    %v306 = vrot.slane %v291, 4
    %v307 = vadd.f32 %v291, %v306
    %v308 = vrot.slane %v307, 2
    %v309 = vadd.f32 %v307, %v308
    %v310 = vrot.slane %v309, 1
    %v311 = vadd.f32 %v309, %v310
    %v312 = vrot.slane %v293, 4
    %v313 = vadd.f32 %v293, %v312
    %v314 = vrot.slane %v313, 2
    %v315 = vadd.f32 %v313, %v314
    %v316 = vrot.slane %v315, 1
    %v317 = vadd.f32 %v315, %v316
    %v318 = vrot.slane %v295, 4
    %v319 = vadd.f32 %v295, %v318
    %v320 = vrot.slane %v319, 2
    %v321 = vadd.f32 %v319, %v320
    %v322 = vrot.slane %v321, 1
    %v323 = vadd.f32 %v321, %v322
    %v324 = vrot.slane %v297, 4
    %v325 = vadd.f32 %v297, %v324
    %v326 = vrot.slane %v325, 2
    %v327 = vadd.f32 %v325, %v326
    %v328 = vrot.slane %v327, 1
    %v329 = vadd.f32 %v327, %v328
    %v330 = vrot.slane %v299, 4
    %v331 = vadd.f32 %v299, %v330
    %v332 = vrot.slane %v331, 2
    %v333 = vadd.f32 %v331, %v332
    %v334 = vrot.slane %v333, 1
    %v335 = vadd.f32 %v333, %v334
    %v336 = vrot.slane %v301, 4
    %v337 = vadd.f32 %v301, %v336
    %v338 = vrot.slane %v337, 2
    %v339 = vadd.f32 %v337, %v338
    %v340 = vrot.slane %v339, 1
    %v341 = vadd.f32 %v339, %v340
    %v342 = vrot.slane %v303, 4
    %v343 = vadd.f32 %v303, %v342
    %v344 = vrot.slane %v343, 2
    %v345 = vadd.f32 %v343, %v344
    %v346 = vrot.slane %v345, 1
    %v347 = vadd.f32 %v345, %v346
    %v348 = vrot.slane %v305, 4
    %v349 = vadd.f32 %v305, %v348
    %v350 = vrot.slane %v349, 2
    %v351 = vadd.f32 %v349, %v350
    %v352 = vrot.slane %v351, 1
    %v353 = vadd.f32 %v351, %v352
    %v354 = vrcp.pop %v311
    %v355 = vmul.f32 %v291, %v354
    %v356 = vrcp.pop %v317
    %v357 = vmul.f32 %v293, %v356
    %v358 = vrcp.pop %v323
    %v359 = vmul.f32 %v295, %v358
    %v360 = vrcp.pop %v329
    %v361 = vmul.f32 %v297, %v360
    %v362 = vrcp.pop %v335
    %v363 = vmul.f32 %v299, %v362
    %v364 = vrcp.pop %v341
    %v365 = vmul.f32 %v301, %v364
    %v366 = vrcp.pop %v347
    %v367 = vmul.f32 %v303, %v366
    %v368 = vrcp.pop %v353
    %v369 = vmul.f32 %v305, %v368
    %v370 = vmul.f32 %v355, %v52
    %v371 = vmul.f32 %v357, %v53
    %v372 = vmul.f32 %v359, %v54
    %v373 = vmul.f32 %v361, %v55
    %v374 = vmul.f32 %v363, %v56
    %v375 = vmul.f32 %v365, %v57
    %v376 = vmul.f32 %v367, %v58
    %v377 = vmul.f32 %v369, %v59
    %v378 = vsel %vm66, %v370, 0.0
    %v379 = vrot.slane %v378, 4
    %v380 = vadd.f32 %v378, %v379
    %v381 = vrot.slane %v380, 2
    %v382 = vadd.f32 %v380, %v381
    %v383 = vrot.slane %v382, 1
    %v384 = vadd.f32 %v382, %v383
    %v385 = vsel %vm66, %v371, 0.0
    %v386 = vrot.slane %v385, 4
    %v387 = vadd.f32 %v385, %v386
    %v388 = vrot.slane %v387, 2
    %v389 = vadd.f32 %v387, %v388
    %v390 = vrot.slane %v389, 1
    %v391 = vadd.f32 %v389, %v390
    %v392 = vsel %vm66, %v372, 0.0
    %v393 = vrot.slane %v392, 4
    %v394 = vadd.f32 %v392, %v393
    %v395 = vrot.slane %v394, 2
    %v396 = vadd.f32 %v394, %v395
    %v397 = vrot.slane %v396, 1
    %v398 = vadd.f32 %v396, %v397
    %v399 = vsel %vm66, %v373, 0.0
    %v400 = vrot.slane %v399, 4
    %v401 = vadd.f32 %v399, %v400
    %v402 = vrot.slane %v401, 2
    %v403 = vadd.f32 %v401, %v402
    %v404 = vrot.slane %v403, 1
    %v405 = vadd.f32 %v403, %v404
    %v406 = vsel %vm66, %v374, 0.0
    %v407 = vrot.slane %v406, 4
    %v408 = vadd.f32 %v406, %v407
    %v409 = vrot.slane %v408, 2
    %v410 = vadd.f32 %v408, %v409
    %v411 = vrot.slane %v410, 1
    %v412 = vadd.f32 %v410, %v411
    %v413 = vsel %vm66, %v375, 0.0
    %v414 = vrot.slane %v413, 4
    %v415 = vadd.f32 %v413, %v414
    %v416 = vrot.slane %v415, 2
    %v417 = vadd.f32 %v415, %v416
    %v418 = vrot.slane %v417, 1
    %v419 = vadd.f32 %v417, %v418
    %v420 = vsel %vm66, %v376, 0.0
    %v421 = vrot.slane %v420, 4
    %v422 = vadd.f32 %v420, %v421
    %v423 = vrot.slane %v422, 2
    %v424 = vadd.f32 %v422, %v423
    %v425 = vrot.slane %v424, 1
    %v426 = vadd.f32 %v424, %v425
    %v427 = vsel %vm66, %v377, 0.0
    %v428 = vrot.slane %v427, 4
    %v429 = vadd.f32 %v427, %v428
    %v430 = vrot.slane %v429, 2
    %v431 = vadd.f32 %v429, %v430
    %v432 = vrot.slane %v431, 1
    %v433 = vadd.f32 %v431, %v432
    %vm442 = vcmask 1041409
    %v443 = vsel %vm442, %v391, %v384
    %vm444 = vcmask 1042434
    %v445 = vsel %vm444, %v398, %v443
    %vm446 = vcmask 1043459
    %v447 = vsel %vm446, %v405, %v445
    %vm448 = vcmask 1044484
    %v449 = vsel %vm448, %v412, %v447
    %vm450 = vcmask 1045509
    %v451 = vsel %vm450, %v419, %v449
    %vm452 = vcmask 1046534
    %v453 = vsel %vm452, %v426, %v451
    %vm454 = vcmask 1047559
    %v455 = vsel %vm454, %v433, %v453
    %457 = vst.msk [vmem:[#allocation7] sm:$0xff] %vm66, %v455
    // Predicated region
    $region26: #{tpu_custom_call.1} parent=1 // pred_check
      _
    $region27: #{tpu_custom_call.1} parent=1 // pred_check_branch
      %459 = sbr.rel (0) target = $region29
    $region28: #{tpu_custom_call.1} parent=1 // pred_region
      %s461 = ssub.s32 128, 128
      %462 = vsyncadd [#allocation4], %s461
      %s464 = sshll.u32 [#allocation7], 4
      %s465 = int_to_ptr.vmem [resolvable:$true] %s464
      %467 = dma.vmem_to_hbm [thread:$0]  %s465, 128, %s4, [#allocation4]
    $region29: #{tpu_custom_call.1} parent=1 // pred_fallthru
      _
    // Predicated region
    $region30: #{tpu_custom_call.1} parent=1 // pred_check
      _
    $region31: #{tpu_custom_call.1} parent=1 // pred_check_branch
      %469 = sbr.rel (0) target = $region33
    $region32: #{tpu_custom_call.1} parent=1 // pred_region
      %470 = dma.done [#allocation4], 128
    $region33: #{tpu_custom_call.1} parent=1 // pred_fallthru
      _
    %471 = vsyncpa [#allocation3], 1
    %472 = vsyncpa [#allocation6], 1
    %473 = vsyncpa [#allocation4], 1

</llo_original>
